<compile_context>
chip_gen: v5e
topology: v5e:2x2
jax: 0.10.0
libtpu: 0.0.40
codegen_flags: <defaults>
</compile_context>

<pallas_src>
import numpy as np
import jax
import jax.numpy as jnp
from jax.experimental import pallas as pl
from jax.experimental.pallas import tpu as pltpu


def make_charcnn_kernel(kernel_sizes, feature_maps, ch_maxlen, ch_emb_size,
                        n_ch_tokens, eps=1e-5):
    feat_dim = sum(feature_maps)
    conv_cols = sum(ks * fm for ks, fm in zip(kernel_sizes, feature_maps))

    # Static column offset of tap k of group g inside the packed projection.
    col_off = []
    col = 0
    for ks, fm in zip(kernel_sizes, feature_maps):
        col_off.append([col + k * fm for k in range(ks)])
        col += ks * fm
    # Static offset of group g inside the concatenated feature / bias vector.
    feat_off = list(np.cumsum([0] + list(feature_maps))[:-1])

    def kernel(ids_ref, emb_ref, wconv_ref, bconv_ref,
               whw1_ref, bhw1_ref, whw2_ref, bhw2_ref, out_ref):
        ids = ids_ref[...]                                   # (B, L) int32
        B, L = ids.shape
        V = n_ch_tokens

        # ---- embedding lookup as exact one-hot selection -----------------
        iota_v = jax.lax.broadcasted_iota(jnp.int32, (B, L, V), 2)
        onehot = (iota_v == ids[:, :, None]).astype(jnp.float32)   # (B, L, V)

        # ---- fold embedding table into the packed conv weights -----------
        # EW[v, :] = projection of embedding row v through every conv tap of
        # every group (single small 2D matmul).
        ew = jnp.dot(emb_ref[...], wconv_ref[...],
                     preferred_element_type=jnp.float32)            # (V, K)
        ew_b = jnp.broadcast_to(ew[None], (B, V, conv_cols))        # (B, V, K)

        # One batched MXU pass = embedding lookup + every conv tap.
        proj = jnp.einsum('blv,bvk->blk', onehot, ew_b,
                          preferred_element_type=jnp.float32)       # (B, L, K)

        # ---- per group: shift-add taps, + bias, tanh, max-pool over t ----
        bconv = bconv_ref[...]                                      # (1, F)
        feats = []
        for g, (ks, fm) in enumerate(zip(kernel_sizes, feature_maps)):
            lout = ch_maxlen - ks + 1
            c0 = col_off[g][0]
            score = proj[:, 0:lout, c0:c0 + fm]                     # tap k = 0
            for k in range(1, ks):
                ck = col_off[g][k]
                score = score + proj[:, k:k + lout, ck:ck + fm]
            fo = feat_off[g]
            bias = bconv[:, fo:fo + fm][None]                       # (1, 1, fm)
            score = jnp.tanh(score + bias)
            feats.append(jnp.max(score, axis=1))                    # (B, fm)

        x = jnp.concatenate(feats, axis=-1)                         # (B, F)

        # ---- Dropout: identity (inference mode) --------------------------

        # ---- BatchNorm1d(affine=False), batch statistics -----------------
        mean = jnp.mean(x, axis=0, keepdims=True)
        var = jnp.mean((x - mean) * (x - mean), axis=0, keepdims=True)
        x = (x - mean) * jax.lax.rsqrt(var + eps)

        # ---- two Highway layers, fc1/fc2 fused into one (F, 2F) dot each -
        def highway(h, w_ref, b_ref):
            pre = jnp.dot(h, w_ref[...],
                          preferred_element_type=jnp.float32) + b_ref[...]
            t = jax.nn.sigmoid(pre[:, :feat_dim])
            g = jnp.maximum(pre[:, feat_dim:], 0.0)
            return t * g + (1.0 - t) * h

        x = highway(x, whw1_ref, bhw1_ref)
        x = highway(x, whw2_ref, bhw2_ref)
        out_ref[...] = x.astype(out_ref.dtype)

    return kernel


def charcnn_forward(x_ids, params, config):
    kernel_sizes = tuple(config["ch_kernel_sizes"])
    feature_maps = tuple(config["ch_feature_maps"])
    L = config["ch_maxlen"]
    E = config["ch_emb_size"]
    V = config["n_ch_tokens"]
    F = sum(feature_maps)
    B = x_ids.shape[0]
    assert x_ids.shape[1] == L

    # Pack every conv tap of every group into one (E, K) weight (column order:
    # group-major, tap-minor) and every conv bias into one (1, F) row.
    w_conv = jnp.concatenate(
        [params["conv"][g][0][k]
         for g in range(len(kernel_sizes)) for k in range(kernel_sizes[g])],
        axis=1)                                                      # (E, K)
    b_conv = jnp.concatenate([bc for (_, bc) in params["conv"]])[None, :]

    # Fuse the two highway Linear layers into one (F, 2F) weight + (1, 2F) bias.
    def fuse_highway(w1, b1, w2, b2):
        return (jnp.concatenate([w1, w2], axis=1),
                jnp.concatenate([b1, b2])[None, :])

    whw1, bhw1 = fuse_highway(*params["hw1"])
    whw2, bhw2 = fuse_highway(*params["hw2"])

    flat = [x_ids.astype(jnp.int32), params["emb"], w_conv, b_conv,
            whw1, bhw1, whw2, bhw2]

    kernel = make_charcnn_kernel(kernel_sizes, feature_maps, L, E, V)
    vmem = pl.BlockSpec(memory_space=pltpu.MemorySpace.VMEM)
    out = pl.pallas_call(
        kernel,
        out_shape=jax.ShapeDtypeStruct((B, F), jnp.float32),
        in_specs=[vmem] * len(flat),
        out_specs=vmem,
    )(*flat)
    return out


def make_params(config, key):
    """Deterministic init mirroring init_ch()/Highway.init_weights():
    uniform(+-0.5/E) embedding (padding row zeroed), xavier-uniform conv
    weights + zero bias, xavier-normal highway weights + zero bias.
    Weights are stored in math form: conv (ks, E, fm); linear (in, out)."""
    V = config["n_ch_tokens"]
    E = config["ch_emb_size"]
    feature_maps = config["ch_feature_maps"]
    kernel_sizes = config["ch_kernel_sizes"]
    F = sum(feature_maps)
    keys = jax.random.split(key, 2 + len(feature_maps) + 2)

    initrange = 0.5 / E
    emb = jax.random.uniform(keys[0], (V, E), jnp.float32, -initrange, initrange)
    emb = emb.at[0].set(0.0)   # padding_idx = 0

    conv = []
    for i, (ks, fm) in enumerate(zip(kernel_sizes, feature_maps)):
        fan_in = 1 * ks * E
        fan_out = fm * ks * E
        bound = float(np.sqrt(6.0 / (fan_in + fan_out)))
        wc = jax.random.uniform(keys[1 + i], (ks, E, fm), jnp.float32,
                                -bound, bound)
        bc = jnp.zeros((fm,), jnp.float32)
        conv.append((wc, bc))

    def highway_params(k):
        k1, k2 = jax.random.split(k)
        std = float(np.sqrt(2.0 / (F + F)))
        w1 = std * jax.random.normal(k1, (F, F), dtype=jnp.float32)
        w2 = std * jax.random.normal(k2, (F, F), dtype=jnp.float32)
        return (w1, jnp.zeros((F,), jnp.float32),
                w2, jnp.zeros((F,), jnp.float32))

    hw1 = highway_params(keys[-2])
    hw2 = highway_params(keys[-1])
    return {"emb": emb, "conv": conv, "hw1": hw1, "hw2": hw2}


def charcnn_reference(x_ids, params, config, eps=1e-5):
    """Pure-JAX reference for validation."""
    kernel_sizes = config["ch_kernel_sizes"]
    L = config["ch_maxlen"]
    hi = jax.lax.Precision.HIGHEST

    embs = params["emb"][x_ids]                                   # (B, L, E)
    feats = []
    for (wc, bc), ks in zip(params["conv"], kernel_sizes):
        lout = L - ks + 1
        patches = jnp.stack([embs[:, k:k + lout, :] for k in range(ks)],
                            axis=2)                               # (B, lout, ks, E)
        score = jnp.einsum("blke,kef->blf", patches, wc, precision=hi) + bc
        feats.append(jnp.max(jnp.tanh(score), axis=1))            # (B, fm)
    x = jnp.concatenate(feats, axis=-1)

    mean = jnp.mean(x, axis=0, keepdims=True)
    var = jnp.mean((x - mean) ** 2, axis=0, keepdims=True)
    x = (x - mean) / jnp.sqrt(var + eps)

    def highway(h, w1, b1, w2, b2):
        t = jax.nn.sigmoid(jnp.dot(h, w1, precision=hi) + b1)
        g = jax.nn.relu(jnp.dot(h, w2, precision=hi) + b2)
        return t * g + (1.0 - t) * h

    x = highway(x, *params["hw1"])
    x = highway(x, *params["hw2"])
    return x


if __name__ == "__main__":
    config = dict(
        n_ch_tokens=40,
        ch_maxlen=12,
        ch_emb_size=16,
        ch_feature_maps=[16, 32],
        ch_kernel_sizes=[2, 3],
    )
    B = 8
    F = sum(config["ch_feature_maps"])

    key = jax.random.PRNGKey(0)
    k_ids, k_p = jax.random.split(key)
    x_ids = jax.random.randint(k_ids, (B, config["ch_maxlen"]), 0,
                               config["n_ch_tokens"], dtype=jnp.int32)
    params = make_params(config, k_p)

    out = charcnn_forward(x_ids, params, config)
    out = jax.block_until_ready(out)

    ref = charcnn_reference(x_ids, params, config)
    np.testing.assert_allclose(np.asarray(out), np.asarray(ref),
                               rtol=2e-3, atol=2e-3)
    assert out.shape == (B, F)
    print("KERNEL_OK")
</pallas_src>

<mosaic_0001>
module attributes {stable_mosaic.version = 11 : i64} {
  func.func @kernel(%arg0: memref<8x12xi32, #tpu.memory_space<vmem>>, %arg1: memref<40x16xf32, #tpu.memory_space<vmem>>, %arg2: memref<16x128xf32, #tpu.memory_space<vmem>>, %arg3: memref<1x48xf32, #tpu.memory_space<vmem>>, %arg4: memref<48x96xf32, #tpu.memory_space<vmem>>, %arg5: memref<1x96xf32, #tpu.memory_space<vmem>>, %arg6: memref<48x96xf32, #tpu.memory_space<vmem>>, %arg7: memref<1x96xf32, #tpu.memory_space<vmem>>, %arg8: memref<8x48xf32, #tpu.memory_space<vmem>>) attributes {dimension_semantics = [], scalar_prefetch = 0 : i64, scratch_operands = 0 : i64, tpu.core_type = #tpu.core_type<tc>} {
    %c0 = arith.constant 0 : index
    %c0_0 = arith.constant 0 : index
    %0 = vector.load %arg0[%c0, %c0_0] : memref<8x12xi32, #tpu.memory_space<vmem>>, vector<8x12xi32>
    %1 = tpu.iota {dimensions = array<i32: 2>} : vector<8x12x40xi32>
    %2 = vector.shape_cast %0 : vector<8x12xi32> to vector<8x12x1xi32>
    %3 = vector.broadcast %2 : vector<8x12x1xi32> to vector<8x12x40xi32>
    %4 = arith.cmpi eq, %1, %3 : vector<8x12x40xi32>
    %5 = arith.extui %4 : vector<8x12x40xi1> to vector<8x12x40xi32>
    %6 = arith.sitofp %5 : vector<8x12x40xi32> to vector<8x12x40xf32>
    %c0_1 = arith.constant 0 : index
    %c0_2 = arith.constant 0 : index
    %7 = vector.load %arg1[%c0_1, %c0_2] : memref<40x16xf32, #tpu.memory_space<vmem>>, vector<40x16xf32>
    %c0_3 = arith.constant 0 : index
    %c0_4 = arith.constant 0 : index
    %8 = vector.load %arg2[%c0_3, %c0_4] : memref<16x128xf32, #tpu.memory_space<vmem>>, vector<16x128xf32>
    %cst = arith.constant dense<0.000000e+00> : vector<40x128xf32>
    %9 = tpu.matmul %7, %8, %cst {dimension_numbers = #tpu.dot_dimension_numbers<[1], [0], [0], [1], [0, 0, 1, 1], [], []>} : vector<40x16xf32>, vector<16x128xf32>, vector<40x128xf32> -> vector<40x128xf32>
    %10 = vector.shape_cast %9 : vector<40x128xf32> to vector<1x40x128xf32>
    %11 = vector.shape_cast %10 : vector<1x40x128xf32> to vector<1x40x128xf32>
    %12 = vector.broadcast %11 : vector<1x40x128xf32> to vector<8x40x128xf32>
    "tpu.trace_start"() <{level = 10 : i32, message = "blv,bvk->blk"}> : () -> ()
    %cst_5 = arith.constant dense<0.000000e+00> : vector<8x12x128xf32>
    %13 = tpu.matmul %6, %12, %cst_5 {dimension_numbers = #tpu.dot_dimension_numbers<[2], [1], [1], [2], [0, 0, 0, 1, 1, 2], [0], [0]>} : vector<8x12x40xf32>, vector<8x40x128xf32>, vector<8x12x128xf32> -> vector<8x12x128xf32>
    "tpu.trace_stop"() : () -> ()
    %c0_6 = arith.constant 0 : index
    %c0_7 = arith.constant 0 : index
    %14 = vector.load %arg3[%c0_6, %c0_7] : memref<1x48xf32, #tpu.memory_space<vmem>>, vector<1x48xf32>
    %15 = vector.extract_strided_slice %13 {offsets = [0, 0, 0], sizes = [8, 11, 16], strides = [1, 1, 1]} : vector<8x12x128xf32> to vector<8x11x16xf32>
    %16 = vector.extract_strided_slice %13 {offsets = [0, 1, 16], sizes = [8, 11, 16], strides = [1, 1, 1]} : vector<8x12x128xf32> to vector<8x11x16xf32>
    %17 = arith.addf %15, %16 : vector<8x11x16xf32>
    %18 = vector.extract_strided_slice %14 {offsets = [0, 0], sizes = [1, 16], strides = [1, 1]} : vector<1x48xf32> to vector<1x16xf32>
    %19 = vector.shape_cast %18 : vector<1x16xf32> to vector<1x1x16xf32>
    %20 = vector.broadcast %19 : vector<1x1x16xf32> to vector<8x11x16xf32>
    %21 = arith.addf %17, %20 : vector<8x11x16xf32>
    %22 = math.tanh %21 : vector<8x11x16xf32>
    %cst_8 = arith.constant dense<0xFF800000> : vector<8x16xf32>
    %23 = vector.multi_reduction <maximumf>, %22, %cst_8 [1] : vector<8x11x16xf32> to vector<8x16xf32>
    %24 = vector.extract_strided_slice %13 {offsets = [0, 0, 32], sizes = [8, 10, 32], strides = [1, 1, 1]} : vector<8x12x128xf32> to vector<8x10x32xf32>
    %25 = vector.extract_strided_slice %13 {offsets = [0, 1, 64], sizes = [8, 10, 32], strides = [1, 1, 1]} : vector<8x12x128xf32> to vector<8x10x32xf32>
    %26 = arith.addf %24, %25 : vector<8x10x32xf32>
    %27 = vector.extract_strided_slice %13 {offsets = [0, 2, 96], sizes = [8, 10, 32], strides = [1, 1, 1]} : vector<8x12x128xf32> to vector<8x10x32xf32>
    %28 = arith.addf %26, %27 : vector<8x10x32xf32>
    %29 = vector.extract_strided_slice %14 {offsets = [0, 16], sizes = [1, 32], strides = [1, 1]} : vector<1x48xf32> to vector<1x32xf32>
    %30 = vector.shape_cast %29 : vector<1x32xf32> to vector<1x1x32xf32>
    %31 = vector.broadcast %30 : vector<1x1x32xf32> to vector<8x10x32xf32>
    %32 = arith.addf %28, %31 : vector<8x10x32xf32>
    %33 = math.tanh %32 : vector<8x10x32xf32>
    %cst_9 = arith.constant dense<0xFF800000> : vector<8x32xf32>
    %34 = vector.multi_reduction <maximumf>, %33, %cst_9 [1] : vector<8x10x32xf32> to vector<8x32xf32>
    %35 = tpu.concatenate %23, %34 in 1 : vector<8x16xf32>, vector<8x32xf32> -> vector<8x48xf32>
    %cst_10 = arith.constant dense<0.000000e+00> : vector<48xf32>
    %36 = vector.multi_reduction <add>, %35, %cst_10 [0] : vector<8x48xf32> to vector<48xf32>
    %37 = vector.shape_cast %36 : vector<48xf32> to vector<1x48xf32>
    %cst_11 = arith.constant 8.000000e+00 : f32
    %38 = vector.broadcast %cst_11 : f32 to vector<1x48xf32>
    %39 = arith.divf %37, %38 : vector<1x48xf32>
    %40 = vector.broadcast %39 : vector<1x48xf32> to vector<8x48xf32>
    %41 = arith.subf %35, %40 : vector<8x48xf32>
    %42 = vector.broadcast %39 : vector<1x48xf32> to vector<8x48xf32>
    %43 = arith.subf %35, %42 : vector<8x48xf32>
    %44 = arith.mulf %41, %43 : vector<8x48xf32>
    %cst_12 = arith.constant dense<0.000000e+00> : vector<48xf32>
    %45 = vector.multi_reduction <add>, %44, %cst_12 [0] : vector<8x48xf32> to vector<48xf32>
    %46 = vector.shape_cast %45 : vector<48xf32> to vector<1x48xf32>
    %cst_13 = arith.constant 8.000000e+00 : f32
    %47 = vector.broadcast %cst_13 : f32 to vector<1x48xf32>
    %48 = arith.divf %46, %47 : vector<1x48xf32>
    %49 = vector.broadcast %39 : vector<1x48xf32> to vector<8x48xf32>
    %50 = arith.subf %35, %49 : vector<8x48xf32>
    %cst_14 = arith.constant 9.99999974E-6 : f32
    %51 = vector.broadcast %cst_14 : f32 to vector<1x48xf32>
    %52 = arith.addf %48, %51 : vector<1x48xf32>
    %53 = math.rsqrt %52 : vector<1x48xf32>
    %54 = vector.broadcast %53 : vector<1x48xf32> to vector<8x48xf32>
    %55 = arith.mulf %50, %54 : vector<8x48xf32>
    %c0_15 = arith.constant 0 : index
    %c0_16 = arith.constant 0 : index
    %56 = vector.load %arg4[%c0_15, %c0_16] : memref<48x96xf32, #tpu.memory_space<vmem>>, vector<48x96xf32>
    %cst_17 = arith.constant dense<0.000000e+00> : vector<8x96xf32>
    %57 = tpu.matmul %55, %56, %cst_17 {dimension_numbers = #tpu.dot_dimension_numbers<[1], [0], [0], [1], [0, 0, 1, 1], [], []>} : vector<8x48xf32>, vector<48x96xf32>, vector<8x96xf32> -> vector<8x96xf32>
    %c0_18 = arith.constant 0 : index
    %c0_19 = arith.constant 0 : index
    %58 = vector.load %arg5[%c0_18, %c0_19] : memref<1x96xf32, #tpu.memory_space<vmem>>, vector<1x96xf32>
    %59 = vector.broadcast %58 : vector<1x96xf32> to vector<8x96xf32>
    %60 = arith.addf %57, %59 : vector<8x96xf32>
    %61 = vector.extract_strided_slice %60 {offsets = [0, 0], sizes = [8, 48], strides = [1, 1]} : vector<8x96xf32> to vector<8x48xf32>
    %62 = arith.negf %61 : vector<8x48xf32>
    %63 = math.exp %62 : vector<8x48xf32>
    %cst_20 = arith.constant 1.000000e+00 : f32
    %64 = vector.broadcast %cst_20 : f32 to vector<8x48xf32>
    %65 = arith.addf %64, %63 : vector<8x48xf32>
    %66 = arith.divf %64, %65 : vector<8x48xf32>
    %67 = vector.extract_strided_slice %60 {offsets = [0, 48], sizes = [8, 48], strides = [1, 1]} : vector<8x96xf32> to vector<8x48xf32>
    %cst_21 = arith.constant 0.000000e+00 : f32
    %68 = vector.broadcast %cst_21 : f32 to vector<8x48xf32>
    %69 = arith.maximumf %67, %68 : vector<8x48xf32>
    %70 = arith.mulf %66, %69 : vector<8x48xf32>
    %cst_22 = arith.constant 1.000000e+00 : f32
    %71 = vector.broadcast %cst_22 : f32 to vector<8x48xf32>
    %72 = arith.subf %71, %66 : vector<8x48xf32>
    %73 = arith.mulf %72, %55 : vector<8x48xf32>
    %74 = arith.addf %70, %73 : vector<8x48xf32>
    %c0_23 = arith.constant 0 : index
    %c0_24 = arith.constant 0 : index
    %75 = vector.load %arg6[%c0_23, %c0_24] : memref<48x96xf32, #tpu.memory_space<vmem>>, vector<48x96xf32>
    %cst_25 = arith.constant dense<0.000000e+00> : vector<8x96xf32>
    %76 = tpu.matmul %74, %75, %cst_25 {dimension_numbers = #tpu.dot_dimension_numbers<[1], [0], [0], [1], [0, 0, 1, 1], [], []>} : vector<8x48xf32>, vector<48x96xf32>, vector<8x96xf32> -> vector<8x96xf32>
    %c0_26 = arith.constant 0 : index
    %c0_27 = arith.constant 0 : index
    %77 = vector.load %arg7[%c0_26, %c0_27] : memref<1x96xf32, #tpu.memory_space<vmem>>, vector<1x96xf32>
    %78 = vector.broadcast %77 : vector<1x96xf32> to vector<8x96xf32>
    %79 = arith.addf %76, %78 : vector<8x96xf32>
    %80 = vector.extract_strided_slice %79 {offsets = [0, 0], sizes = [8, 48], strides = [1, 1]} : vector<8x96xf32> to vector<8x48xf32>
    %81 = arith.negf %80 : vector<8x48xf32>
    %82 = math.exp %81 : vector<8x48xf32>
    %cst_28 = arith.constant 1.000000e+00 : f32
    %83 = vector.broadcast %cst_28 : f32 to vector<8x48xf32>
    %84 = arith.addf %83, %82 : vector<8x48xf32>
    %85 = arith.divf %83, %84 : vector<8x48xf32>
    %86 = vector.extract_strided_slice %79 {offsets = [0, 48], sizes = [8, 48], strides = [1, 1]} : vector<8x96xf32> to vector<8x48xf32>
    %cst_29 = arith.constant 0.000000e+00 : f32
    %87 = vector.broadcast %cst_29 : f32 to vector<8x48xf32>
    %88 = arith.maximumf %86, %87 : vector<8x48xf32>
    %89 = arith.mulf %85, %88 : vector<8x48xf32>
    %cst_30 = arith.constant 1.000000e+00 : f32
    %90 = vector.broadcast %cst_30 : f32 to vector<8x48xf32>
    %91 = arith.subf %90, %85 : vector<8x48xf32>
    %92 = arith.mulf %91, %74 : vector<8x48xf32>
    %93 = arith.addf %89, %92 : vector<8x48xf32>
    %c0_31 = arith.constant 0 : index
    %c0_32 = arith.constant 0 : index
    %94 = vector.load %arg8[%c0_31, %c0_32] : memref<8x48xf32, #tpu.memory_space<vmem>>, vector<8x48xf32>
    tpu.vector_store %arg8[%c0_31, %c0_32], %93 {strides = array<i32>} : memref<8x48xf32, #tpu.memory_space<vmem>>, vector<8x48xf32>,
    return
  }
}

</mosaic_0001>

<llo_original>
// kernel: tpu_custom_call.1
$region0: #{tpu_custom_call.1}
  #allocation0 [shape = 'u32[]', space=smem, size = 0x4, offset = 0x4, fixed_abs, tag = 'smem constant byte address 0x4 - core index']
  #allocation1 [shape = 'u32[72,128]{1,0:T(1,128)}', space=vmem, size = 0x9000, scoped, tag = 'internal scratch']
  %s0 = inlined_call_operand.vmem [shape: s32[8,12], index: 0, kind: input, shape index: {}]
  %s1 = inlined_call_operand.vmem [shape: f32[40,16], index: 1, kind: input, shape index: {}]
  %s2 = inlined_call_operand.hbm [shape: f32[16,128], index: 2, kind: input, shape index: {}]
  %s3 = inlined_call_operand.vmem [shape: f32[1,48], index: 3, kind: input, shape index: {}]
  %s4 = inlined_call_operand.vmem [shape: f32[48,96], index: 4, kind: input, shape index: {}]
  %s5 = inlined_call_operand.vmem [shape: f32[1,96], index: 5, kind: input, shape index: {}]
  %s6 = inlined_call_operand.hbm [shape: f32[48,96], index: 6, kind: input, shape index: {}]
  %s7 = inlined_call_operand.vmem [shape: f32[1,96], index: 7, kind: input, shape index: {}]
  %s8 = inlined_call_operand.hbm [shape: f32[8,48], index: 8, kind: output, shape index: {}]
  %s9 = sld [smem:[#allocation0]]
  $region50: #{tpu_custom_call.1} parent=0
    _
  %s11 = ssub.s32 1, %s9
  %s12 = scalar_select 0, %s11, %s9
  $region1: #{tpu_custom_call.1} parent=0
    #allocation2 [shape = 'u8[8192]{0}', space=vmem, size = 0x2000, scoped, tag = 'input window, operand 2, single buffered']
    #allocation3 [shape = 's32[1]{0}', space=sflag, size = 0x4, scoped, tag = 'scoped memory for tpu_custom_call.1']
    #allocation4 [shape = 's32[1]{0}', space=sflag, size = 0x4, scoped, tag = 'scoped memory for tpu_custom_call.1']
    #allocation5 [shape = 'u8[24576]{0}', space=vmem, size = 0x6000, scoped, tag = 'input window, operand 6, single buffered']
    #allocation6 [shape = 's32[1]{0}', space=sflag, size = 0x4, scoped, tag = 'scoped memory for tpu_custom_call.1']
    #allocation7 [shape = 'u8[4096]{0}', space=vmem, size = 0x1000, scoped, tag = 'output window, operand 0, single buffered']
    %13 = vsyncpa [#allocation3], 0
    %14 = vsyncpa [#allocation6], 0
    %15 = vsyncpa [#allocation4], 0
    // Predicated region
    $region2: #{tpu_custom_call.1} parent=1 // pred_check
      _
    $region3: #{tpu_custom_call.1} parent=1 // pred_check_branch
      %17 = sbr.rel (0) target = $region5
    $region4: #{tpu_custom_call.1} parent=1 // pred_region
      _
    $region5: #{tpu_custom_call.1} parent=1 // pred_fallthru
      _
    // Predicated region
    $region6: #{tpu_custom_call.1} parent=1 // pred_check
      _
    $region7: #{tpu_custom_call.1} parent=1 // pred_check_branch
      %19 = sbr.rel (0) target = $region9
    $region8: #{tpu_custom_call.1} parent=1 // pred_region
      _
    $region9: #{tpu_custom_call.1} parent=1 // pred_fallthru
      _
    // Predicated region
    $region10: #{tpu_custom_call.1} parent=1 // pred_check
      _
    $region11: #{tpu_custom_call.1} parent=1 // pred_check_branch
      %21 = sbr.rel (0) target = $region13
    $region12: #{tpu_custom_call.1} parent=1 // pred_region
      %23 = vsyncadd [#allocation3], 0
      %s24 = sshll.u32 %s2, 4
      %s25 = int_to_ptr.hbm [resolvable:$true] %s24
      %s26 = sshll.u32 [#allocation2], 4
      %s27 = int_to_ptr.vmem [resolvable:$true] %s26
      %32 = dma.hbm_to_vmem [thread:$0]  %s25, 256, %s27, [#allocation3], 128, 128, 8
    $region13: #{tpu_custom_call.1} parent=1 // pred_fallthru
      _
    // Predicated region
    $region14: #{tpu_custom_call.1} parent=1 // pred_check
      _
    $region15: #{tpu_custom_call.1} parent=1 // pred_check_branch
      %34 = sbr.rel (0) target = $region17
    $region16: #{tpu_custom_call.1} parent=1 // pred_region
      _
    $region17: #{tpu_custom_call.1} parent=1 // pred_fallthru
      _
    // Predicated region
    $region18: #{tpu_custom_call.1} parent=1 // pred_check
      _
    $region19: #{tpu_custom_call.1} parent=1 // pred_check_branch
      %36 = sbr.rel (0) target = $region21
    $region20: #{tpu_custom_call.1} parent=1 // pred_region
      _
    $region21: #{tpu_custom_call.1} parent=1 // pred_fallthru
      _
    // Predicated region
    $region22: #{tpu_custom_call.1} parent=1 // pred_check
      _
    $region23: #{tpu_custom_call.1} parent=1 // pred_check_branch
      %38 = sbr.rel (0) target = $region25
    $region24: #{tpu_custom_call.1} parent=1 // pred_region
      _
    $region25: #{tpu_custom_call.1} parent=1 // pred_fallthru
      _
    // Predicated region
    $region26: #{tpu_custom_call.1} parent=1 // pred_check
      _
    $region27: #{tpu_custom_call.1} parent=1 // pred_check_branch
      %40 = sbr.rel (0) target = $region29
    $region28: #{tpu_custom_call.1} parent=1 // pred_region
      %42 = vsyncadd [#allocation6], 0
      %s43 = sshll.u32 %s6, 4
      %s44 = int_to_ptr.hbm [resolvable:$true] %s43
      %s45 = sshll.u32 [#allocation5], 4
      %s46 = int_to_ptr.vmem [resolvable:$true] %s45
      %51 = dma.hbm_to_vmem [thread:$0]  %s44, 768, %s46, [#allocation6], 128, 128, 8
    $region29: #{tpu_custom_call.1} parent=1 // pred_fallthru
      _
    // Predicated region
    $region30: #{tpu_custom_call.1} parent=1 // pred_check
      _
    $region31: #{tpu_custom_call.1} parent=1 // pred_check_branch
      %53 = sbr.rel (0) target = $region33
    $region32: #{tpu_custom_call.1} parent=1 // pred_region
      _
    $region33: #{tpu_custom_call.1} parent=1 // pred_fallthru
      _
    // Predicated region
    $region34: #{tpu_custom_call.1} parent=1 // pred_check
      _
    $region35: #{tpu_custom_call.1} parent=1 // pred_check_branch
      %55 = sbr.rel (0) target = $region37
    $region36: #{tpu_custom_call.1} parent=1 // pred_region
      %57 = dma.done [#allocation3], 256
    $region37: #{tpu_custom_call.1} parent=1 // pred_fallthru
      _
    // Predicated region
    $region38: #{tpu_custom_call.1} parent=1 // pred_check
      _
    $region39: #{tpu_custom_call.1} parent=1 // pred_check_branch
      %59 = sbr.rel (0) target = $region41
    $region40: #{tpu_custom_call.1} parent=1 // pred_region
      %61 = dma.done [#allocation6], 768
    $region41: #{tpu_custom_call.1} parent=1 // pred_fallthru
      _
    %v62 = vld [vmem:[%s0] sm:$0xff]
    %v63 = vlaneseq
    %v64 = vand.u32 %v63, 127
    %v65 = vperm.slane %v62, 0
    %v66 = vlaneseq
    %v67 = vshrl.u32 %v66, 7
    %69 = vset.pattern.permute.xlu0 %v67
    %70 = vperm.xlu0 %69, %v65
    %v71 = vpop.permute.xlu0 %70
    %v72 = vlaneseq
    %v73 = vshrl.u32 %v72, 7
    %v74 = vadd.s32 %v73, 8
    %75 = vset.pattern.permute.xlu0 %v74
    %76 = vperm.xlu0 %75, %v65
    %v77 = vpop.permute.xlu0 %76
    %v78 = vperm.slane %v62, 1
    %v79 = vlaneseq
    %v80 = vshrl.u32 %v79, 7
    %82 = vset.pattern.permute.xlu0 %v80
    %83 = vperm.xlu0 %82, %v78
    %v84 = vpop.permute.xlu0 %83
    %v85 = vlaneseq
    %v86 = vshrl.u32 %v85, 7
    %v87 = vadd.s32 %v86, 8
    %88 = vset.pattern.permute.xlu0 %v87
    %89 = vperm.xlu0 %88, %v78
    %v90 = vpop.permute.xlu0 %89
    %v91 = vperm.slane %v62, 2
    %v92 = vlaneseq
    %v93 = vshrl.u32 %v92, 7
    %95 = vset.pattern.permute.xlu0 %v93
    %96 = vperm.xlu0 %95, %v91
    %v97 = vpop.permute.xlu0 %96
    %v98 = vlaneseq
    %v99 = vshrl.u32 %v98, 7
    %v100 = vadd.s32 %v99, 8
    %101 = vset.pattern.permute.xlu0 %v100
    %102 = vperm.xlu0 %101, %v91
    %v103 = vpop.permute.xlu0 %102
    %v104 = vperm.slane %v62, 3
    %v105 = vlaneseq
    %v106 = vshrl.u32 %v105, 7
    %108 = vset.pattern.permute.xlu0 %v106
    %109 = vperm.xlu0 %108, %v104
    %v110 = vpop.permute.xlu0 %109
    %v111 = vlaneseq
    %v112 = vshrl.u32 %v111, 7
    %v113 = vadd.s32 %v112, 8
    %114 = vset.pattern.permute.xlu0 %v113
    %115 = vperm.xlu0 %114, %v104
    %v116 = vpop.permute.xlu0 %115
    %v117 = vperm.slane %v62, 4
    %v118 = vlaneseq
    %v119 = vshrl.u32 %v118, 7
    %121 = vset.pattern.permute.xlu0 %v119
    %122 = vperm.xlu0 %121, %v117
    %v123 = vpop.permute.xlu0 %122
    %v124 = vlaneseq
    %v125 = vshrl.u32 %v124, 7
    %v126 = vadd.s32 %v125, 8
    %127 = vset.pattern.permute.xlu0 %v126
    %128 = vperm.xlu0 %127, %v117
    %v129 = vpop.permute.xlu0 %128
    %v130 = vperm.slane %v62, 5
    %v131 = vlaneseq
    %v132 = vshrl.u32 %v131, 7
    %134 = vset.pattern.permute.xlu0 %v132
    %135 = vperm.xlu0 %134, %v130
    %v136 = vpop.permute.xlu0 %135
    %v137 = vlaneseq
    %v138 = vshrl.u32 %v137, 7
    %v139 = vadd.s32 %v138, 8
    %140 = vset.pattern.permute.xlu0 %v139
    %141 = vperm.xlu0 %140, %v130
    %v142 = vpop.permute.xlu0 %141
    %v143 = vperm.slane %v62, 6
    %v144 = vlaneseq
    %v145 = vshrl.u32 %v144, 7
    %147 = vset.pattern.permute.xlu0 %v145
    %148 = vperm.xlu0 %147, %v143
    %v149 = vpop.permute.xlu0 %148
    %v150 = vlaneseq
    %v151 = vshrl.u32 %v150, 7
    %v152 = vadd.s32 %v151, 8
    %153 = vset.pattern.permute.xlu0 %v152
    %154 = vperm.xlu0 %153, %v143
    %v155 = vpop.permute.xlu0 %154
    %v156 = vperm.slane %v62, 7
    %v157 = vlaneseq
    %v158 = vshrl.u32 %v157, 7
    %160 = vset.pattern.permute.xlu0 %v158
    %161 = vperm.xlu0 %160, %v156
    %v162 = vpop.permute.xlu0 %161
    %v163 = vlaneseq
    %v164 = vshrl.u32 %v163, 7
    %v165 = vadd.s32 %v164, 8
    %166 = vset.pattern.permute.xlu0 %v165
    %167 = vperm.xlu0 %166, %v156
    %v168 = vpop.permute.xlu0 %167
    %vm169 = vcmp.eq.s32.totalorder %v64, %v71
    %vm170 = vcmp.eq.s32.totalorder %v64, %v77
    %vm171 = vcmp.eq.s32.totalorder %v64, %v84
    %vm172 = vcmp.eq.s32.totalorder %v64, %v90
    %vm173 = vcmp.eq.s32.totalorder %v64, %v97
    %vm174 = vcmp.eq.s32.totalorder %v64, %v103
    %vm175 = vcmp.eq.s32.totalorder %v64, %v110
    %vm176 = vcmp.eq.s32.totalorder %v64, %v116
    %vm177 = vcmp.eq.s32.totalorder %v64, %v123
    %vm178 = vcmp.eq.s32.totalorder %v64, %v129
    %vm179 = vcmp.eq.s32.totalorder %v64, %v136
    %vm180 = vcmp.eq.s32.totalorder %v64, %v142
    %vm181 = vcmp.eq.s32.totalorder %v64, %v149
    %vm182 = vcmp.eq.s32.totalorder %v64, %v155
    %vm183 = vcmp.eq.s32.totalorder %v64, %v162
    %vm184 = vcmp.eq.s32.totalorder %v64, %v168
    %v185 = vsel %vm169, 1, 0
    %v186 = vsel %vm170, 1, 0
    %v187 = vsel %vm171, 1, 0
    %v188 = vsel %vm172, 1, 0
    %v189 = vsel %vm173, 1, 0
    %v190 = vsel %vm174, 1, 0
    %v191 = vsel %vm175, 1, 0
    %v192 = vsel %vm176, 1, 0
    %v193 = vsel %vm177, 1, 0
    %v194 = vsel %vm178, 1, 0
    %v195 = vsel %vm179, 1, 0
    %v196 = vsel %vm180, 1, 0
    %v197 = vsel %vm181, 1, 0
    %v198 = vsel %vm182, 1, 0
    %v199 = vsel %vm183, 1, 0
    %v200 = vsel %vm184, 1, 0
    %v201 = vcvt.s32.f32 %v185
    %v202 = vcvt.s32.f32 %v186
    %v203 = vcvt.s32.f32 %v187
    %v204 = vcvt.s32.f32 %v188
    %v205 = vcvt.s32.f32 %v189
    %v206 = vcvt.s32.f32 %v190
    %v207 = vcvt.s32.f32 %v191
    %v208 = vcvt.s32.f32 %v192
    %v209 = vcvt.s32.f32 %v193
    %v210 = vcvt.s32.f32 %v194
    %v211 = vcvt.s32.f32 %v195
    %v212 = vcvt.s32.f32 %v196
    %v213 = vcvt.s32.f32 %v197
    %v214 = vcvt.s32.f32 %v198
    %v215 = vcvt.s32.f32 %v199
    %v216 = vcvt.s32.f32 %v200
    %v217 = vld [vmem:[%s1] sm:$0xff]
    %v218 = vld [vmem:[%s1 + $0x8] sm:$0xff]
    %v219 = vld [vmem:[%s1 + $0x10] sm:$0xff]
    %v220 = vld [vmem:[%s1 + $0x18] sm:$0xff]
    %v221 = vld [vmem:[%s1 + $0x20] sm:$0xff]
    %v222 = vld [vmem:[#allocation2] sm:$0xff]
    %v223 = vld [vmem:[#allocation2 + $0x8] sm:$0xff]
    %vm224 = vcmask 130048
    %v226 = vsel %vm224, %v217, 0
    %v229 = vsel %vm224, %v218, 0
    %v232 = vsel %vm224, %v219, 0
    %v235 = vsel %vm224, %v220, 0
    %v238 = vsel %vm224, %v221, 0
    %240 = vmatpush.msra.mxu0 0.0
    %241 = vmatpush.msra.mxu0 0.0
    %242 = vmatpush.msra.mxu0 0.0
    %243 = vmatpush.msra.mxu0 0.0
    %244 = vmatpush.msra.mxu0 0.0
    %245 = vmatpush.msra.mxu0 0.0
    %246 = vmatpush.msra.mxu0 0.0
    %247 = vmatpush.msra.mxu0 0.0
    %248 = vmatpush.msra.mxu0 0.0
    %249 = vmatpush.msra.mxu0 0.0
    %250 = vmatpush.msra.mxu0 0.0
    %251 = vmatpush.msra.mxu0 0.0
    %252 = vmatpush.msra.mxu0 0.0
    %253 = vmatpush.msra.mxu0 0.0
    %254 = vmatpush.msra.mxu0 %v223
    %255 = vmatpush.msra.mxu0 %v222
    %256 = vmatmul.f32.gmra.mxu0 %v226
    %v257 = vpop.f32.mrf.mxu0
    %v258 = vadd.f32 0.0, %v257
    %259 = vmatmul.f32.gmra.mxu0 %v229
    %v260 = vpop.f32.mrf.mxu0
    %v261 = vadd.f32 0.0, %v260
    %262 = vmatmul.f32.gmra.mxu0 %v232
    %v263 = vpop.f32.mrf.mxu0
    %v264 = vadd.f32 0.0, %v263
    %265 = vmatmul.f32.gmra.mxu0 %v235
    %v266 = vpop.f32.mrf.mxu0
    %v267 = vadd.f32 0.0, %v266
    %268 = vmatmul.f32.gmra.mxu0 %v238
    %v269 = vpop.f32.mrf.mxu0
    %v270 = vadd.f32 0.0, %v269
    %271 = vdwg.mxu0
    %vm272 = vcmask 326656
    %v274 = vsel %vm272, %v201, 0
    %v277 = vsel %vm272, %v202, 0
    %279 = vmatpush.msra.mxu0 0.0
    %280 = vmatpush.msra.mxu0 0.0
    %281 = vmatpush.msra.mxu0 0.0
    %282 = vmatpush.msra.mxu0 0.0
    %283 = vmatpush.msra.mxu0 0.0
    %284 = vmatpush.msra.mxu0 0.0
    %285 = vmatpush.msra.mxu0 0.0
    %286 = vmatpush.msra.mxu0 0.0
    %287 = vmatpush.msra.mxu0 0.0
    %288 = vmatpush.msra.mxu0 0.0
    %289 = vmatpush.msra.mxu0 0.0
    %290 = vmatpush.msra.mxu0 %v270
    %291 = vmatpush.msra.mxu0 %v267
    %292 = vmatpush.msra.mxu0 %v264
    %293 = vmatpush.msra.mxu0 %v261
    %294 = vmatpush.msra.mxu0 %v258
    %295 = vmatmul.f32.gmra.mxu0 %v274
    %v296 = vpop.f32.mrf.mxu0
    %v297 = vadd.f32 0.0, %v296
    %298 = vmatmul.f32.gmra.mxu0 %v277
    %v299 = vpop.f32.mrf.mxu0
    %v300 = vadd.f32 0.0, %v299
    %301 = vdwg.mxu0
    %v303 = vsel %vm272, %v203, 0
    %v306 = vsel %vm272, %v204, 0
    %308 = vmatpush.msra.mxu0 0.0
    %309 = vmatpush.msra.mxu0 0.0
    %310 = vmatpush.msra.mxu0 0.0
    %311 = vmatpush.msra.mxu0 0.0
    %312 = vmatpush.msra.mxu0 0.0
    %313 = vmatpush.msra.mxu0 0.0
    %314 = vmatpush.msra.mxu0 0.0
    %315 = vmatpush.msra.mxu0 0.0
    %316 = vmatpush.msra.mxu0 0.0
    %317 = vmatpush.msra.mxu0 0.0
    %318 = vmatpush.msra.mxu0 0.0
    %319 = vmatpush.msra.mxu0 %v270
    %320 = vmatpush.msra.mxu0 %v267
    %321 = vmatpush.msra.mxu0 %v264
    %322 = vmatpush.msra.mxu0 %v261
    %323 = vmatpush.msra.mxu0 %v258
    %324 = vmatmul.f32.gmra.mxu0 %v303
    %v325 = vpop.f32.mrf.mxu0
    %v326 = vadd.f32 0.0, %v325
    %327 = vmatmul.f32.gmra.mxu0 %v306
    %v328 = vpop.f32.mrf.mxu0
    %v329 = vadd.f32 0.0, %v328
    %330 = vdwg.mxu0
    %v332 = vsel %vm272, %v205, 0
    %v335 = vsel %vm272, %v206, 0
    %337 = vmatpush.msra.mxu0 0.0
    %338 = vmatpush.msra.mxu0 0.0
    %339 = vmatpush.msra.mxu0 0.0
    %340 = vmatpush.msra.mxu0 0.0
    %341 = vmatpush.msra.mxu0 0.0
    %342 = vmatpush.msra.mxu0 0.0
    %343 = vmatpush.msra.mxu0 0.0
    %344 = vmatpush.msra.mxu0 0.0
    %345 = vmatpush.msra.mxu0 0.0
    %346 = vmatpush.msra.mxu0 0.0
    %347 = vmatpush.msra.mxu0 0.0
    %348 = vmatpush.msra.mxu0 %v270
    %349 = vmatpush.msra.mxu0 %v267
    %350 = vmatpush.msra.mxu0 %v264
    %351 = vmatpush.msra.mxu0 %v261
    %352 = vmatpush.msra.mxu0 %v258
    %353 = vmatmul.f32.gmra.mxu0 %v332
    %v354 = vpop.f32.mrf.mxu0
    %v355 = vadd.f32 0.0, %v354
    %356 = vmatmul.f32.gmra.mxu0 %v335
    %v357 = vpop.f32.mrf.mxu0
    %v358 = vadd.f32 0.0, %v357
    %359 = vdwg.mxu0
    %v361 = vsel %vm272, %v207, 0
    %v364 = vsel %vm272, %v208, 0
    %366 = vmatpush.msra.mxu0 0.0
    %367 = vmatpush.msra.mxu0 0.0
    %368 = vmatpush.msra.mxu0 0.0
    %369 = vmatpush.msra.mxu0 0.0
    %370 = vmatpush.msra.mxu0 0.0
    %371 = vmatpush.msra.mxu0 0.0
    %372 = vmatpush.msra.mxu0 0.0
    %373 = vmatpush.msra.mxu0 0.0
    %374 = vmatpush.msra.mxu0 0.0
    %375 = vmatpush.msra.mxu0 0.0
    %376 = vmatpush.msra.mxu0 0.0
    %377 = vmatpush.msra.mxu0 %v270
    %378 = vmatpush.msra.mxu0 %v267
    %379 = vmatpush.msra.mxu0 %v264
    %380 = vmatpush.msra.mxu0 %v261
    %381 = vmatpush.msra.mxu0 %v258
    %382 = vmatmul.f32.gmra.mxu0 %v361
    %v383 = vpop.f32.mrf.mxu0
    %v384 = vadd.f32 0.0, %v383
    %385 = vmatmul.f32.gmra.mxu0 %v364
    %v386 = vpop.f32.mrf.mxu0
    %v387 = vadd.f32 0.0, %v386
    %388 = vdwg.mxu0
    %v390 = vsel %vm272, %v209, 0
    %v393 = vsel %vm272, %v210, 0
    %395 = vmatpush.msra.mxu0 0.0
    %396 = vmatpush.msra.mxu0 0.0
    %397 = vmatpush.msra.mxu0 0.0
    %398 = vmatpush.msra.mxu0 0.0
    %399 = vmatpush.msra.mxu0 0.0
    %400 = vmatpush.msra.mxu0 0.0
    %401 = vmatpush.msra.mxu0 0.0
    %402 = vmatpush.msra.mxu0 0.0
    %403 = vmatpush.msra.mxu0 0.0
    %404 = vmatpush.msra.mxu0 0.0
    %405 = vmatpush.msra.mxu0 0.0
    %406 = vmatpush.msra.mxu0 %v270
    %407 = vmatpush.msra.mxu0 %v267
    %408 = vmatpush.msra.mxu0 %v264
    %409 = vmatpush.msra.mxu0 %v261
    %410 = vmatpush.msra.mxu0 %v258
    %411 = vmatmul.f32.gmra.mxu0 %v390
    %v412 = vpop.f32.mrf.mxu0
    %v413 = vadd.f32 0.0, %v412
    %414 = vmatmul.f32.gmra.mxu0 %v393
    %v415 = vpop.f32.mrf.mxu0
    %v416 = vadd.f32 0.0, %v415
    %417 = vdwg.mxu0
    %v419 = vsel %vm272, %v211, 0
    %v422 = vsel %vm272, %v212, 0
    %424 = vmatpush.msra.mxu0 0.0
    %425 = vmatpush.msra.mxu0 0.0
    %426 = vmatpush.msra.mxu0 0.0
    %427 = vmatpush.msra.mxu0 0.0
    %428 = vmatpush.msra.mxu0 0.0
    %429 = vmatpush.msra.mxu0 0.0
    %430 = vmatpush.msra.mxu0 0.0
    %431 = vmatpush.msra.mxu0 0.0
    %432 = vmatpush.msra.mxu0 0.0
    %433 = vmatpush.msra.mxu0 0.0
    %434 = vmatpush.msra.mxu0 0.0
    %435 = vmatpush.msra.mxu0 %v270
    %436 = vmatpush.msra.mxu0 %v267
    %437 = vmatpush.msra.mxu0 %v264
    %438 = vmatpush.msra.mxu0 %v261
    %439 = vmatpush.msra.mxu0 %v258
    %440 = vmatmul.f32.gmra.mxu0 %v419
    %v441 = vpop.f32.mrf.mxu0
    %v442 = vadd.f32 0.0, %v441
    %443 = vmatmul.f32.gmra.mxu0 %v422
    %v444 = vpop.f32.mrf.mxu0
    %v445 = vadd.f32 0.0, %v444
    %446 = vdwg.mxu0
    %v448 = vsel %vm272, %v213, 0
    %v451 = vsel %vm272, %v214, 0
    %453 = vmatpush.msra.mxu0 0.0
    %454 = vmatpush.msra.mxu0 0.0
    %455 = vmatpush.msra.mxu0 0.0
    %456 = vmatpush.msra.mxu0 0.0
    %457 = vmatpush.msra.mxu0 0.0
    %458 = vmatpush.msra.mxu0 0.0
    %459 = vmatpush.msra.mxu0 0.0
    %460 = vmatpush.msra.mxu0 0.0
    %461 = vmatpush.msra.mxu0 0.0
    %462 = vmatpush.msra.mxu0 0.0
    %463 = vmatpush.msra.mxu0 0.0
    %464 = vmatpush.msra.mxu0 %v270
    %465 = vmatpush.msra.mxu0 %v267
    %466 = vmatpush.msra.mxu0 %v264
    %467 = vmatpush.msra.mxu0 %v261
    %468 = vmatpush.msra.mxu0 %v258
    %469 = vmatmul.f32.gmra.mxu0 %v448
    %v470 = vpop.f32.mrf.mxu0
    %v471 = vadd.f32 0.0, %v470
    %472 = vmatmul.f32.gmra.mxu0 %v451
    %v473 = vpop.f32.mrf.mxu0
    %v474 = vadd.f32 0.0, %v473
    %475 = vdwg.mxu0
    %v477 = vsel %vm272, %v215, 0
    %v480 = vsel %vm272, %v216, 0
    %482 = vmatpush.msra.mxu0 0.0
    %483 = vmatpush.msra.mxu0 0.0
    %484 = vmatpush.msra.mxu0 0.0
    %485 = vmatpush.msra.mxu0 0.0
    %486 = vmatpush.msra.mxu0 0.0
    %487 = vmatpush.msra.mxu0 0.0
    %488 = vmatpush.msra.mxu0 0.0
    %489 = vmatpush.msra.mxu0 0.0
    %490 = vmatpush.msra.mxu0 0.0
    %491 = vmatpush.msra.mxu0 0.0
    %492 = vmatpush.msra.mxu0 0.0
    %493 = vmatpush.msra.mxu0 %v270
    %494 = vmatpush.msra.mxu0 %v267
    %495 = vmatpush.msra.mxu0 %v264
    %496 = vmatpush.msra.mxu0 %v261
    %497 = vmatpush.msra.mxu0 %v258
    %498 = vmatmul.f32.gmra.mxu0 %v477
    %v499 = vpop.f32.mrf.mxu0
    %v500 = vadd.f32 0.0, %v499
    %501 = vmatmul.f32.gmra.mxu0 %v480
    %v502 = vpop.f32.mrf.mxu0
    %v503 = vadd.f32 0.0, %v502
    %504 = vdwg.mxu0
    %v505 = vld [vmem:[%s3] sm:$0x1]
    %vm522 = vcmask 1046528
    %v523 = vrot.slane %v297, 1
    %v524 = vrot.slane %v300, 1
    %v525 = vsel %vm522, %v523, %v524
    %v526 = vrot.slane %v326, 1
    %v527 = vrot.slane %v329, 1
    %v528 = vsel %vm522, %v526, %v527
    %v529 = vrot.slane %v355, 1
    %v530 = vrot.slane %v358, 1
    %v531 = vsel %vm522, %v529, %v530
    %v532 = vrot.slane %v384, 1
    %v533 = vrot.slane %v387, 1
    %v534 = vsel %vm522, %v532, %v533
    %v535 = vrot.slane %v413, 1
    %v536 = vrot.slane %v416, 1
    %v537 = vsel %vm522, %v535, %v536
    %v538 = vrot.slane %v442, 1
    %v539 = vrot.slane %v445, 1
    %v540 = vsel %vm522, %v538, %v539
    %v541 = vrot.slane %v471, 1
    %v542 = vrot.slane %v474, 1
    %v543 = vsel %vm522, %v541, %v542
    %v544 = vrot.slane %v500, 1
    %v545 = vrot.slane %v503, 1
    %v546 = vsel %vm522, %v544, %v545
    %547 = vrot.lane.b32.xlu0 %v525, 112
    %v548 = vpop.permute.xlu0 %547
    %549 = vrot.lane.b32.xlu0 %v524, 112
    %v550 = vpop.permute.xlu0 %549
    %551 = vrot.lane.b32.xlu0 %v528, 112
    %v552 = vpop.permute.xlu0 %551
    %553 = vrot.lane.b32.xlu0 %v527, 112
    %v554 = vpop.permute.xlu0 %553
    %555 = vrot.lane.b32.xlu0 %v531, 112
    %v556 = vpop.permute.xlu0 %555
    %557 = vrot.lane.b32.xlu0 %v530, 112
    %v558 = vpop.permute.xlu0 %557
    %559 = vrot.lane.b32.xlu0 %v534, 112
    %v560 = vpop.permute.xlu0 %559
    %561 = vrot.lane.b32.xlu0 %v533, 112
    %v562 = vpop.permute.xlu0 %561
    %563 = vrot.lane.b32.xlu0 %v537, 112
    %v564 = vpop.permute.xlu0 %563
    %565 = vrot.lane.b32.xlu0 %v536, 112
    %v566 = vpop.permute.xlu0 %565
    %567 = vrot.lane.b32.xlu0 %v540, 112
    %v568 = vpop.permute.xlu0 %567
    %569 = vrot.lane.b32.xlu0 %v539, 112
    %v570 = vpop.permute.xlu0 %569
    %571 = vrot.lane.b32.xlu0 %v543, 112
    %v572 = vpop.permute.xlu0 %571
    %573 = vrot.lane.b32.xlu0 %v542, 112
    %v574 = vpop.permute.xlu0 %573
    %575 = vrot.lane.b32.xlu0 %v546, 112
    %v576 = vpop.permute.xlu0 %575
    %577 = vrot.lane.b32.xlu0 %v545, 112
    %v578 = vpop.permute.xlu0 %577
    %v595 = vadd.f32 %v297, %v548
    %v596 = vadd.f32 %v300, %v550
    %v597 = vadd.f32 %v326, %v552
    %v598 = vadd.f32 %v329, %v554
    %v599 = vadd.f32 %v355, %v556
    %v600 = vadd.f32 %v358, %v558
    %v601 = vadd.f32 %v384, %v560
    %v602 = vadd.f32 %v387, %v562
    %v603 = vadd.f32 %v413, %v564
    %v604 = vadd.f32 %v416, %v566
    %v605 = vadd.f32 %v442, %v568
    %v606 = vadd.f32 %v445, %v570
    %v607 = vadd.f32 %v471, %v572
    %v608 = vadd.f32 %v474, %v574
    %v609 = vadd.f32 %v500, %v576
    %v610 = vadd.f32 %v503, %v578
    %v612 = vperm.slane %v505, 0
    %v614 = vadd.f32 %v595, %v612
    %v615 = vadd.f32 %v596, %v612
    %v616 = vadd.f32 %v597, %v612
    %v617 = vadd.f32 %v598, %v612
    %v618 = vadd.f32 %v599, %v612
    %v619 = vadd.f32 %v600, %v612
    %v620 = vadd.f32 %v601, %v612
    %v621 = vadd.f32 %v602, %v612
    %v622 = vadd.f32 %v603, %v612
    %v623 = vadd.f32 %v604, %v612
    %v624 = vadd.f32 %v605, %v612
    %v625 = vadd.f32 %v606, %v612
    %v626 = vadd.f32 %v607, %v612
    %v627 = vadd.f32 %v608, %v612
    %v628 = vadd.f32 %v609, %v612
    %v629 = vadd.f32 %v610, %v612
    %v630 = vtanh.pop %v614
    %v631 = vtanh.pop %v615
    %v632 = vtanh.pop %v616
    %v633 = vtanh.pop %v617
    %v634 = vtanh.pop %v618
    %v635 = vtanh.pop %v619
    %v636 = vtanh.pop %v620
    %v637 = vtanh.pop %v621
    %v638 = vtanh.pop %v622
    %v639 = vtanh.pop %v623
    %v640 = vtanh.pop %v624
    %v641 = vtanh.pop %v625
    %v642 = vtanh.pop %v626
    %v643 = vtanh.pop %v627
    %v644 = vtanh.pop %v628
    %v645 = vtanh.pop %v629
    %v646 = vsel %vm224, %v630, -inf
    %vm647 = vcmask 124928
    %v648 = vsel %vm647, %v631, -inf
    %v649 = vmax.f32 %v646, %v648
    %v650 = vrot.slane %v649, 4
    %v651 = vmax.f32 %v649, %v650
    %v652 = vrot.slane %v651, 2
    %v653 = vmax.f32 %v651, %v652
    %v654 = vrot.slane %v653, 1
    %v655 = vmax.f32 %v653, %v654
    %v656 = vsel %vm224, %v632, -inf
    %v657 = vsel %vm647, %v633, -inf
    %v658 = vmax.f32 %v656, %v657
    %v659 = vrot.slane %v658, 4
    %v660 = vmax.f32 %v658, %v659
    %v661 = vrot.slane %v660, 2
    %v662 = vmax.f32 %v660, %v661
    %v663 = vrot.slane %v662, 1
    %v664 = vmax.f32 %v662, %v663
    %v665 = vsel %vm224, %v634, -inf
    %v666 = vsel %vm647, %v635, -inf
    %v667 = vmax.f32 %v665, %v666
    %v668 = vrot.slane %v667, 4
    %v669 = vmax.f32 %v667, %v668
    %v670 = vrot.slane %v669, 2
    %v671 = vmax.f32 %v669, %v670
    %v672 = vrot.slane %v671, 1
    %v673 = vmax.f32 %v671, %v672
    %v674 = vsel %vm224, %v636, -inf
    %v675 = vsel %vm647, %v637, -inf
    %v676 = vmax.f32 %v674, %v675
    %v677 = vrot.slane %v676, 4
    %v678 = vmax.f32 %v676, %v677
    %v679 = vrot.slane %v678, 2
    %v680 = vmax.f32 %v678, %v679
    %v681 = vrot.slane %v680, 1
    %v682 = vmax.f32 %v680, %v681
    %v683 = vsel %vm224, %v638, -inf
    %v684 = vsel %vm647, %v639, -inf
    %v685 = vmax.f32 %v683, %v684
    %v686 = vrot.slane %v685, 4
    %v687 = vmax.f32 %v685, %v686
    %v688 = vrot.slane %v687, 2
    %v689 = vmax.f32 %v687, %v688
    %v690 = vrot.slane %v689, 1
    %v691 = vmax.f32 %v689, %v690
    %v692 = vsel %vm224, %v640, -inf
    %v693 = vsel %vm647, %v641, -inf
    %v694 = vmax.f32 %v692, %v693
    %v695 = vrot.slane %v694, 4
    %v696 = vmax.f32 %v694, %v695
    %v697 = vrot.slane %v696, 2
    %v698 = vmax.f32 %v696, %v697
    %v699 = vrot.slane %v698, 1
    %v700 = vmax.f32 %v698, %v699
    %v701 = vsel %vm224, %v642, -inf
    %v702 = vsel %vm647, %v643, -inf
    %v703 = vmax.f32 %v701, %v702
    %v704 = vrot.slane %v703, 4
    %v705 = vmax.f32 %v703, %v704
    %v706 = vrot.slane %v705, 2
    %v707 = vmax.f32 %v705, %v706
    %v708 = vrot.slane %v707, 1
    %v709 = vmax.f32 %v707, %v708
    %v710 = vsel %vm224, %v644, -inf
    %v711 = vsel %vm647, %v645, -inf
    %v712 = vmax.f32 %v710, %v711
    %v713 = vrot.slane %v712, 4
    %v714 = vmax.f32 %v712, %v713
    %v715 = vrot.slane %v714, 2
    %v716 = vmax.f32 %v714, %v715
    %v717 = vrot.slane %v716, 1
    %v718 = vmax.f32 %v716, %v717
    %719 = vrot.lane.b32.xlu0 %v525, 96
    %v720 = vpop.permute.xlu0 %719
    %721 = vrot.lane.b32.xlu0 %v524, 96
    %v722 = vpop.permute.xlu0 %721
    %723 = vrot.lane.b32.xlu0 %v528, 96
    %v724 = vpop.permute.xlu0 %723
    %725 = vrot.lane.b32.xlu0 %v527, 96
    %v726 = vpop.permute.xlu0 %725
    %727 = vrot.lane.b32.xlu0 %v531, 96
    %v728 = vpop.permute.xlu0 %727
    %729 = vrot.lane.b32.xlu0 %v530, 96
    %v730 = vpop.permute.xlu0 %729
    %731 = vrot.lane.b32.xlu0 %v534, 96
    %v732 = vpop.permute.xlu0 %731
    %733 = vrot.lane.b32.xlu0 %v533, 96
    %v734 = vpop.permute.xlu0 %733
    %735 = vrot.lane.b32.xlu0 %v537, 96
    %v736 = vpop.permute.xlu0 %735
    %737 = vrot.lane.b32.xlu0 %v536, 96
    %v738 = vpop.permute.xlu0 %737
    %739 = vrot.lane.b32.xlu0 %v540, 96
    %v740 = vpop.permute.xlu0 %739
    %741 = vrot.lane.b32.xlu0 %v539, 96
    %v742 = vpop.permute.xlu0 %741
    %743 = vrot.lane.b32.xlu0 %v543, 96
    %v744 = vpop.permute.xlu0 %743
    %745 = vrot.lane.b32.xlu0 %v542, 96
    %v746 = vpop.permute.xlu0 %745
    %747 = vrot.lane.b32.xlu0 %v546, 96
    %v748 = vpop.permute.xlu0 %747
    %749 = vrot.lane.b32.xlu0 %v545, 96
    %v750 = vpop.permute.xlu0 %749
    %v767 = vadd.f32 %v297, %v720
    %v768 = vadd.f32 %v300, %v722
    %v769 = vadd.f32 %v326, %v724
    %v770 = vadd.f32 %v329, %v726
    %v771 = vadd.f32 %v355, %v728
    %v772 = vadd.f32 %v358, %v730
    %v773 = vadd.f32 %v384, %v732
    %v774 = vadd.f32 %v387, %v734
    %v775 = vadd.f32 %v413, %v736
    %v776 = vadd.f32 %v416, %v738
    %v777 = vadd.f32 %v442, %v740
    %v778 = vadd.f32 %v445, %v742
    %v779 = vadd.f32 %v471, %v744
    %v780 = vadd.f32 %v474, %v746
    %v781 = vadd.f32 %v500, %v748
    %v782 = vadd.f32 %v503, %v750
    %vm783 = vcmask 1045504
    %v784 = vrot.slane %v297, 2
    %v785 = vrot.slane %v300, 2
    %v786 = vsel %vm783, %v784, %v785
    %v787 = vrot.slane %v326, 2
    %v788 = vrot.slane %v329, 2
    %v789 = vsel %vm783, %v787, %v788
    %v790 = vrot.slane %v355, 2
    %v791 = vrot.slane %v358, 2
    %v792 = vsel %vm783, %v790, %v791
    %v793 = vrot.slane %v384, 2
    %v794 = vrot.slane %v387, 2
    %v795 = vsel %vm783, %v793, %v794
    %v796 = vrot.slane %v413, 2
    %v797 = vrot.slane %v416, 2
    %v798 = vsel %vm783, %v796, %v797
    %v799 = vrot.slane %v442, 2
    %v800 = vrot.slane %v445, 2
    %v801 = vsel %vm783, %v799, %v800
    %v802 = vrot.slane %v471, 2
    %v803 = vrot.slane %v474, 2
    %v804 = vsel %vm783, %v802, %v803
    %v805 = vrot.slane %v500, 2
    %v806 = vrot.slane %v503, 2
    %v807 = vsel %vm783, %v805, %v806
    %808 = vrot.lane.b32.xlu0 %v786, 64
    %v809 = vpop.permute.xlu0 %808
    %810 = vrot.lane.b32.xlu0 %v785, 64
    %v811 = vpop.permute.xlu0 %810
    %812 = vrot.lane.b32.xlu0 %v789, 64
    %v813 = vpop.permute.xlu0 %812
    %814 = vrot.lane.b32.xlu0 %v788, 64
    %v815 = vpop.permute.xlu0 %814
    %816 = vrot.lane.b32.xlu0 %v792, 64
    %v817 = vpop.permute.xlu0 %816
    %818 = vrot.lane.b32.xlu0 %v791, 64
    %v819 = vpop.permute.xlu0 %818
    %820 = vrot.lane.b32.xlu0 %v795, 64
    %v821 = vpop.permute.xlu0 %820
    %822 = vrot.lane.b32.xlu0 %v794, 64
    %v823 = vpop.permute.xlu0 %822
    %824 = vrot.lane.b32.xlu0 %v798, 64
    %v825 = vpop.permute.xlu0 %824
    %826 = vrot.lane.b32.xlu0 %v797, 64
    %v827 = vpop.permute.xlu0 %826
    %828 = vrot.lane.b32.xlu0 %v801, 64
    %v829 = vpop.permute.xlu0 %828
    %830 = vrot.lane.b32.xlu0 %v800, 64
    %v831 = vpop.permute.xlu0 %830
    %832 = vrot.lane.b32.xlu0 %v804, 64
    %v833 = vpop.permute.xlu0 %832
    %834 = vrot.lane.b32.xlu0 %v803, 64
    %v835 = vpop.permute.xlu0 %834
    %836 = vrot.lane.b32.xlu0 %v807, 64
    %v837 = vpop.permute.xlu0 %836
    %838 = vrot.lane.b32.xlu0 %v806, 64
    %v839 = vpop.permute.xlu0 %838
    %v856 = vadd.f32 %v767, %v809
    %v857 = vadd.f32 %v768, %v811
    %v858 = vadd.f32 %v769, %v813
    %v859 = vadd.f32 %v770, %v815
    %v860 = vadd.f32 %v771, %v817
    %v861 = vadd.f32 %v772, %v819
    %v862 = vadd.f32 %v773, %v821
    %v863 = vadd.f32 %v774, %v823
    %v864 = vadd.f32 %v775, %v825
    %v865 = vadd.f32 %v776, %v827
    %v866 = vadd.f32 %v777, %v829
    %v867 = vadd.f32 %v778, %v831
    %v868 = vadd.f32 %v779, %v833
    %v869 = vadd.f32 %v780, %v835
    %v870 = vadd.f32 %v781, %v837
    %v871 = vadd.f32 %v782, %v839
    %872 = vrot.lane.b32.xlu0 %v612, 16
    %v873 = vpop.permute.xlu0 %872
    %v875 = vadd.f32 %v856, %v873
    %v876 = vadd.f32 %v857, %v873
    %v877 = vadd.f32 %v858, %v873
    %v878 = vadd.f32 %v859, %v873
    %v879 = vadd.f32 %v860, %v873
    %v880 = vadd.f32 %v861, %v873
    %v881 = vadd.f32 %v862, %v873
    %v882 = vadd.f32 %v863, %v873
    %v883 = vadd.f32 %v864, %v873
    %v884 = vadd.f32 %v865, %v873
    %v885 = vadd.f32 %v866, %v873
    %v886 = vadd.f32 %v867, %v873
    %v887 = vadd.f32 %v868, %v873
    %v888 = vadd.f32 %v869, %v873
    %v889 = vadd.f32 %v870, %v873
    %v890 = vadd.f32 %v871, %v873
    %v891 = vtanh.pop %v875
    %v892 = vtanh.pop %v876
    %v893 = vtanh.pop %v877
    %v894 = vtanh.pop %v878
    %v895 = vtanh.pop %v879
    %v896 = vtanh.pop %v880
    %v897 = vtanh.pop %v881
    %v898 = vtanh.pop %v882
    %v899 = vtanh.pop %v883
    %v900 = vtanh.pop %v884
    %v901 = vtanh.pop %v885
    %v902 = vtanh.pop %v886
    %v903 = vtanh.pop %v887
    %v904 = vtanh.pop %v888
    %v905 = vtanh.pop %v889
    %v906 = vtanh.pop %v890
    %vm907 = vcmask 523520
    %v908 = vsel %vm907, %v891, -inf
    %vm909 = vcmask 517376
    %v910 = vsel %vm909, %v892, -inf
    %v911 = vmax.f32 %v908, %v910
    %v912 = vrot.slane %v911, 4
    %v913 = vmax.f32 %v911, %v912
    %v914 = vrot.slane %v913, 2
    %v915 = vmax.f32 %v913, %v914
    %v916 = vrot.slane %v915, 1
    %v917 = vmax.f32 %v915, %v916
    %v918 = vsel %vm907, %v893, -inf
    %v919 = vsel %vm909, %v894, -inf
    %v920 = vmax.f32 %v918, %v919
    %v921 = vrot.slane %v920, 4
    %v922 = vmax.f32 %v920, %v921
    %v923 = vrot.slane %v922, 2
    %v924 = vmax.f32 %v922, %v923
    %v925 = vrot.slane %v924, 1
    %v926 = vmax.f32 %v924, %v925
    %v927 = vsel %vm907, %v895, -inf
    %v928 = vsel %vm909, %v896, -inf
    %v929 = vmax.f32 %v927, %v928
    %v930 = vrot.slane %v929, 4
    %v931 = vmax.f32 %v929, %v930
    %v932 = vrot.slane %v931, 2
    %v933 = vmax.f32 %v931, %v932
    %v934 = vrot.slane %v933, 1
    %v935 = vmax.f32 %v933, %v934
    %v936 = vsel %vm907, %v897, -inf
    %v937 = vsel %vm909, %v898, -inf
    %v938 = vmax.f32 %v936, %v937
    %v939 = vrot.slane %v938, 4
    %v940 = vmax.f32 %v938, %v939
    %v941 = vrot.slane %v940, 2
    %v942 = vmax.f32 %v940, %v941
    %v943 = vrot.slane %v942, 1
    %v944 = vmax.f32 %v942, %v943
    %v945 = vsel %vm907, %v899, -inf
    %v946 = vsel %vm909, %v900, -inf
    %v947 = vmax.f32 %v945, %v946
    %v948 = vrot.slane %v947, 4
    %v949 = vmax.f32 %v947, %v948
    %v950 = vrot.slane %v949, 2
    %v951 = vmax.f32 %v949, %v950
    %v952 = vrot.slane %v951, 1
    %v953 = vmax.f32 %v951, %v952
    %v954 = vsel %vm907, %v901, -inf
    %v955 = vsel %vm909, %v902, -inf
    %v956 = vmax.f32 %v954, %v955
    %v957 = vrot.slane %v956, 4
    %v958 = vmax.f32 %v956, %v957
    %v959 = vrot.slane %v958, 2
    %v960 = vmax.f32 %v958, %v959
    %v961 = vrot.slane %v960, 1
    %v962 = vmax.f32 %v960, %v961
    %v963 = vsel %vm907, %v903, -inf
    %v964 = vsel %vm909, %v904, -inf
    %v965 = vmax.f32 %v963, %v964
    %v966 = vrot.slane %v965, 4
    %v967 = vmax.f32 %v965, %v966
    %v968 = vrot.slane %v967, 2
    %v969 = vmax.f32 %v967, %v968
    %v970 = vrot.slane %v969, 1
    %v971 = vmax.f32 %v969, %v970
    %v972 = vsel %vm907, %v905, -inf
    %v973 = vsel %vm909, %v906, -inf
    %v974 = vmax.f32 %v972, %v973
    %v975 = vrot.slane %v974, 4
    %v976 = vmax.f32 %v974, %v975
    %v977 = vrot.slane %v976, 2
    %v978 = vmax.f32 %v976, %v977
    %v979 = vrot.slane %v978, 1
    %v980 = vmax.f32 %v978, %v979
    %vm989 = vcmask 1041409
    %v990 = vsel %vm989, %v664, %v655
    %vm991 = vcmask 1042434
    %v992 = vsel %vm991, %v673, %v990
    %vm993 = vcmask 1043459
    %v994 = vsel %vm993, %v682, %v992
    %vm995 = vcmask 1044484
    %v996 = vsel %vm995, %v691, %v994
    %vm997 = vcmask 1045509
    %v998 = vsel %vm997, %v700, %v996
    %vm999 = vcmask 1046534
    %v1000 = vsel %vm999, %v709, %v998
    %vm1001 = vcmask 1047559
    %v1002 = vsel %vm1001, %v718, %v1000
    %v1012 = vsel %vm989, %v926, %v917
    %v1013 = vsel %vm991, %v935, %v1012
    %v1014 = vsel %vm993, %v944, %v1013
    %v1015 = vsel %vm995, %v953, %v1014
    %v1016 = vsel %vm997, %v962, %v1015
    %v1017 = vsel %vm999, %v971, %v1016
    %v1018 = vsel %vm1001, %v980, %v1017
    %1019 = vrot.lane.b32.xlu0 %v1018, 112
    %v1020 = vpop.permute.xlu0 %1019
    %v1022 = vsel %vm224, %v1002, %v1020
    %vm1023 = vcmask 392192
    %v1024 = vsel %vm1023, %v1022, 0.0
    %v1025 = vrot.slane %v1024, 4
    %v1026 = vadd.f32 %v1024, %v1025
    %v1027 = vrot.slane %v1026, 2
    %v1028 = vadd.f32 %v1026, %v1027
    %v1029 = vrot.slane %v1028, 1
    %v1030 = vadd.f32 %v1028, %v1029
    %v1031 = vrcp.pop 8.0
    %v1032 = vmul.f32 8.0, %v1031
    %v1033 = vsub.f32 1.0, %v1032
    %v1034 = vmul.f32 %v1031, %v1033
    %v1035 = vadd.f32 %v1031, %v1034
    %vm1036 = vweird.f32 %v1031
    %v1037 = vsel %vm1036, %v1031, %v1035
    %v1038 = vmul.f32 %v1030, %v1037
    %v1039 = vsub.f32 %v1022, %v1038
    %v1040 = vmul.f32 %v1039, %v1039
    %v1041 = vsel %vm1023, %v1040, 0.0
    %v1042 = vrot.slane %v1041, 4
    %v1043 = vadd.f32 %v1041, %v1042
    %v1044 = vrot.slane %v1043, 2
    %v1045 = vadd.f32 %v1043, %v1044
    %v1046 = vrot.slane %v1045, 1
    %v1047 = vadd.f32 %v1045, %v1046
    %v1048 = vmul.f32 %v1047, %v1037
    %v1049 = vadd.f32 %v1048, 1e-05
    %v1050 = vrsqrt.pop %v1049
    %v1051 = vmul.f32 %v1050, %v1049
    %v1052 = vmul.f32 %v1051, %v1050
    %v1053 = vmul.f32 0.5, %v1052
    %v1054 = vsub.f32 1.5, %v1053
    %v1055 = vmul.f32 %v1050, %v1054
    %vm1056 = vweird.f32 %v1049
    %vm1057 = vweird.f32 %v1050
    %vm1058 = vmor %vm1056, %vm1057
    %v1059 = vsel %vm1058, %v1050, %v1055
    %v1060 = vmul.f32 %v1039, %v1059
    %v1061 = vld [vmem:[%s4] sm:$0xff]
    %v1062 = vld [vmem:[%s4 + $0x8] sm:$0xff]
    %v1063 = vld [vmem:[%s4 + $0x10] sm:$0xff]
    %v1064 = vld [vmem:[%s4 + $0x18] sm:$0xff]
    %v1065 = vld [vmem:[%s4 + $0x20] sm:$0xff]
    %v1066 = vld [vmem:[%s4 + $0x28] sm:$0xff]
    %v1067 = vld [vmem:[%s5] sm:$0x1]
    %v1069 = vperm.slane %v1067, 0
    %v1072 = vsel %vm1023, %v1060, 0
    %1074 = vmatpush.msra.mxu0 0.0
    %1075 = vmatpush.msra.mxu0 0.0
    %1076 = vmatpush.msra.mxu0 0.0
    %1077 = vmatpush.msra.mxu0 0.0
    %1078 = vmatpush.msra.mxu0 0.0
    %1079 = vmatpush.msra.mxu0 0.0
    %1080 = vmatpush.msra.mxu0 0.0
    %1081 = vmatpush.msra.mxu0 0.0
    %1082 = vmatpush.msra.mxu0 0.0
    %1083 = vmatpush.msra.mxu0 0.0
    %1084 = vmatpush.msra.mxu0 %v1066
    %1085 = vmatpush.msra.mxu0 %v1065
    %1086 = vmatpush.msra.mxu0 %v1064
    %1087 = vmatpush.msra.mxu0 %v1063
    %1088 = vmatpush.msra.mxu0 %v1062
    %1089 = vmatpush.msra.mxu0 %v1061
    %1090 = vmatmul.f32.gmra.mxu0 %v1072
    %v1091 = vpop.f32.mrf.mxu0
    %v1092 = vadd.f32 %v1069, %v1091
    %1093 = vdwg.mxu0
    %v1094 = vxor.u32 %v1092, 2147483648
    %v1095 = vmul.f32 %v1094, 1.442695
    %v1096 = vpow.pop %v1095
    %v1097 = vadd.f32 %v1096, 1.0
    %v1098 = vrcp.pop %v1097
    %v1099 = vmul.f32 %v1097, %v1098
    %v1100 = vsub.f32 1.0, %v1099
    %v1101 = vmul.f32 %v1098, %v1100
    %v1102 = vadd.f32 %v1098, %v1101
    %vm1103 = vweird.f32 %v1097
    %vm1104 = vweird.f32 %v1098
    %vm1105 = vmor %vm1103, %vm1104
    %v1106 = vsel %vm1105, %v1098, %v1102
    %v1107 = vand.u32 2147483647, %v1097
    %vm1108 = vcmp.eq.f32.partialorder %v1107, 8.507059e+37
    %v1109 = vand.u32 %v1097, 2147483648
    %v1110 = vor.u32 1.1754944e-38, %v1109
    %v1111 = vsel %vm1108, %v1110, %v1106
    %v1112 = vmul.f32 1.0, %v1111
    %v1113 = vmax.f32 %v1092, 0.0
    %1115 = vrot.lane.b32.xlu0 %v1113, 80
    %v1116 = vpop.permute.xlu0 %1115
    %v1118 = vmul.f32 %v1112, %v1116
    %v1119 = vsub.f32 1.0, %v1112
    %v1120 = vmul.f32 %v1119, %v1060
    %v1121 = vadd.f32 %v1118, %v1120
    %v1122 = vld [vmem:[#allocation5] sm:$0xff]
    %v1123 = vld [vmem:[#allocation5 + $0x8] sm:$0xff]
    %v1124 = vld [vmem:[#allocation5 + $0x10] sm:$0xff]
    %v1125 = vld [vmem:[#allocation5 + $0x18] sm:$0xff]
    %v1126 = vld [vmem:[#allocation5 + $0x20] sm:$0xff]
    %v1127 = vld [vmem:[#allocation5 + $0x28] sm:$0xff]
    %v1128 = vld [vmem:[%s7] sm:$0x1]
    %v1130 = vperm.slane %v1128, 0
    %v1133 = vsel %vm1023, %v1121, 0
    %1135 = vmatpush.msra.mxu0 0.0
    %1136 = vmatpush.msra.mxu0 0.0
    %1137 = vmatpush.msra.mxu0 0.0
    %1138 = vmatpush.msra.mxu0 0.0
    %1139 = vmatpush.msra.mxu0 0.0
    %1140 = vmatpush.msra.mxu0 0.0
    %1141 = vmatpush.msra.mxu0 0.0
    %1142 = vmatpush.msra.mxu0 0.0
    %1143 = vmatpush.msra.mxu0 0.0
    %1144 = vmatpush.msra.mxu0 0.0
    %1145 = vmatpush.msra.mxu0 %v1127
    %1146 = vmatpush.msra.mxu0 %v1126
    %1147 = vmatpush.msra.mxu0 %v1125
    %1148 = vmatpush.msra.mxu0 %v1124
    %1149 = vmatpush.msra.mxu0 %v1123
    %1150 = vmatpush.msra.mxu0 %v1122
    %1151 = vmatmul.f32.gmra.mxu0 %v1133
    %v1152 = vpop.f32.mrf.mxu0
    %v1153 = vadd.f32 %v1130, %v1152
    %1154 = vdwg.mxu0
    %v1155 = vxor.u32 %v1153, 2147483648
    %v1156 = vmul.f32 %v1155, 1.442695
    %v1157 = vpow.pop %v1156
    %v1158 = vadd.f32 %v1157, 1.0
    %v1159 = vrcp.pop %v1158
    %v1160 = vmul.f32 %v1158, %v1159
    %v1161 = vsub.f32 1.0, %v1160
    %v1162 = vmul.f32 %v1159, %v1161
    %v1163 = vadd.f32 %v1159, %v1162
    %vm1164 = vweird.f32 %v1158
    %vm1165 = vweird.f32 %v1159
    %vm1166 = vmor %vm1164, %vm1165
    %v1167 = vsel %vm1166, %v1159, %v1163
    %v1168 = vand.u32 2147483647, %v1158
    %vm1169 = vcmp.eq.f32.partialorder %v1168, 8.507059e+37
    %v1170 = vand.u32 %v1158, 2147483648
    %v1171 = vor.u32 1.1754944e-38, %v1170
    %v1172 = vsel %vm1169, %v1171, %v1167
    %v1173 = vmul.f32 1.0, %v1172
    %v1174 = vmax.f32 %v1153, 0.0
    %1176 = vrot.lane.b32.xlu0 %v1174, 80
    %v1177 = vpop.permute.xlu0 %1176
    %v1179 = vmul.f32 %v1173, %v1177
    %v1180 = vsub.f32 1.0, %v1173
    %v1181 = vmul.f32 %v1180, %v1121
    %v1182 = vadd.f32 %v1179, %v1181
    %1183 = vst.msk [vmem:[#allocation7] sm:$0xff] %vm1023, %v1182
    // Predicated region
    $region42: #{tpu_custom_call.1} parent=1 // pred_check
      _
    $region43: #{tpu_custom_call.1} parent=1 // pred_check_branch
      %1185 = sbr.rel (0) target = $region45
    $region44: #{tpu_custom_call.1} parent=1 // pred_region
      %1187 = vsyncadd [#allocation4], 0
      %s1189 = sshll.u32 [#allocation7], 4
      %s1190 = int_to_ptr.vmem [resolvable:$true] %s1189
      %s1191 = sshll.u32 %s8, 4
      %s1192 = int_to_ptr.hbm [resolvable:$true] %s1191
      %1194 = dma.vmem_to_hbm [thread:$0]  %s1190, 128, %s1192, [#allocation4]
    $region45: #{tpu_custom_call.1} parent=1 // pred_fallthru
      _
    // Predicated region
    $region46: #{tpu_custom_call.1} parent=1 // pred_check
      _
    $region47: #{tpu_custom_call.1} parent=1 // pred_check_branch
      %1196 = sbr.rel (0) target = $region49
    $region48: #{tpu_custom_call.1} parent=1 // pred_region
      %1198 = dma.done [#allocation4], 128
    $region49: #{tpu_custom_call.1} parent=1 // pred_fallthru
      _
    %1199 = vsyncpa [#allocation3], 1
    %1200 = vsyncpa [#allocation6], 1
    %1201 = vsyncpa [#allocation4], 1

</llo_original>
